<compile_context>
chip_gen: v6e
topology: v6e:2x2x1
jax: 0.10.0
libtpu: 0.0.40
codegen_flags: <defaults>
</compile_context>

<pallas_src>
import functools

import jax
import jax.numpy as jnp
from jax.experimental import pallas as pl
from jax.experimental.pallas import tpu as pltpu


def _round_up(x, m):
    return ((x + m - 1) // m) * m


def _embedding_net_kernel(x_ref, w1_ref, b1_ref, w2_ref, b2_ref,
                          emb_ref, outz_ref, *, batch, tile_b):
    # x_ref:   (TB, R)  f32 batch tile of input features (cast to bf16 here)
    # w1_ref:  (R,  E)  bf16 fc1 weight (transposed), b1_ref: (1, E) f32
    # w2_ref:  (E,  Z)  bf16 fc2 weight (transposed), b2_ref: (1, Z) f32
    # emb_ref: (TB, E)  relu(fc1(x))
    # outz_ref:(TB, Z)  L2-normalized fc2(embedding) along dim=1
    x = x_ref[...].astype(w1_ref.dtype)      # VPU cast, free under DMA/MXU

    # fc1 + ReLU  (bf16 MXU matmul, f32 accumulation, VPU max)
    h = jnp.dot(x, w1_ref[...], preferred_element_type=jnp.float32) + b1_ref[...]
    emb = jnp.maximum(h, 0.0)

    # fc2 (bf16 inputs, f32 accumulation)
    z = jnp.dot(emb.astype(w2_ref.dtype), w2_ref[...],
                preferred_element_type=jnp.float32) + b2_ref[...]

    # F.normalize(z, dim=1): z / max(||z||_2, 1e-12) == z * rsqrt(max(||z||^2, 1e-24))
    # rsqrt goes to the (otherwise idle) EUP slot; multiply replaces the divide.
    sq = jnp.sum(z * z, axis=1, keepdims=True)
    inv = jax.lax.rsqrt(jnp.maximum(sq, 1e-24))
    out = z * inv

    if batch % tile_b != 0:
        # Ragged tail block: zero rows >= batch so nothing bogus (e.g. NaNs from
        # uninitialized tail input rows) can reach HBM; valid rows are untouched.
        row = (pl.program_id(0) * tile_b
               + jax.lax.broadcasted_iota(jnp.int32, (tile_b, 1), 0))
        valid = row < batch
        emb = jnp.where(valid, emb, 0.0)
        out = jnp.where(valid, out, 0.0)

    emb_ref[...] = emb.astype(emb_ref.dtype)
    outz_ref[...] = out.astype(outz_ref.dtype)


def _auto_tile_b(B, R, E, Z, embedding_dtype, outz_dtype):
    """Pick the batch tile: as large as fits a conservative VMEM budget (cap 2048),
    and -- when more than one grid step is needed -- an even grid so v7x's two
    TensorCores get balanced halves under dimension_semantics=('parallel',)."""
    bytes_per_row = (R * 4                                      # f32 features in
                     + E * jnp.dtype(embedding_dtype).itemsize  # embedding out
                     + Z * jnp.dtype(outz_dtype).itemsize)      # out_z out
    resident = 2 * ((R * E + E * Z) * 2 + (E + Z) * 4)          # bf16 W, f32 b (dbl-buffered)
    budget = max(1 << 20, (24 << 20) - resident)                # headroom under 32 MiB scoped default
    cap = max(8, (budget // (2 * max(1, bytes_per_row))) // 8 * 8)   # tiles are double-buffered
    tile_b = max(8, min(2048, cap, _round_up(B, 8)))
    tile_b = (tile_b // 8) * 8
    grid_b = pl.cdiv(B, tile_b)
    if grid_b > 1 and grid_b % 2 == 1:
        tile_b = max(8, _round_up(pl.cdiv(B, grid_b + 1), 8))
    return tile_b


def embedding_net_forward(features, w1_t, b1, w2_t, b2, *, tile_b=None,
                          matmul_dtype=jnp.bfloat16,
                          embedding_dtype=jnp.float32,
                          outz_dtype=jnp.float32):
    """features: (B, R).  w1_t: (R, E), b1: (E,), w2_t: (E, Z), b2: (Z,).

    Returns (embedding, out_z) matching the torch module's forward
    (defaults to float32 outputs; pass bfloat16 dtypes to cut HBM traffic).
    """
    B, R = features.shape
    E = w1_t.shape[1]
    Z = w2_t.shape[1]

    if tile_b is None:
        tile_b = _auto_tile_b(B, R, E, Z, embedding_dtype, outz_dtype)
    tile_b = max(8, _round_up(tile_b, 8))          # f32/bf16 sublane tiling
    grid_b = pl.cdiv(B, tile_b)

    # Weights are tiny -> cast to bf16 in the wrapper; features stay f32 (cast
    # in-kernel) to avoid an extra un-fused HBM round-trip for the big operand.
    x = features.astype(jnp.float32)
    w1 = w1_t.astype(matmul_dtype)
    w2 = w2_t.astype(matmul_dtype)
    b1_2d = b1.reshape(1, E).astype(jnp.float32)
    b2_2d = b2.reshape(1, Z).astype(jnp.float32)

    kernel = functools.partial(_embedding_net_kernel, batch=B, tile_b=tile_b)

    out_shapes = (
        jax.ShapeDtypeStruct((B, E), embedding_dtype),   # embedding
        jax.ShapeDtypeStruct((B, Z), outz_dtype),        # out_z (normalized)
    )

    emb, out_z = pl.pallas_call(
        kernel,
        out_shape=out_shapes,
        grid_spec=pltpu.PrefetchScalarGridSpec(
            num_scalar_prefetch=0,
            grid=(grid_b,),
            in_specs=[
                pl.BlockSpec((tile_b, R), lambda i: (i, 0)),   # features tile
                pl.BlockSpec((R, E), lambda i: (0, 0)),        # W1^T (resident)
                pl.BlockSpec((1, E), lambda i: (0, 0)),        # b1
                pl.BlockSpec((E, Z), lambda i: (0, 0)),        # W2^T (resident)
                pl.BlockSpec((1, Z), lambda i: (0, 0)),        # b2
            ],
            out_specs=[
                pl.BlockSpec((tile_b, E), lambda i: (i, 0)),   # embedding tile
                pl.BlockSpec((tile_b, Z), lambda i: (i, 0)),   # out_z tile
            ],
        ),
        compiler_params=pltpu.CompilerParams(
            dimension_semantics=("parallel",),
        ),
    )(x, w1, b1_2d, w2, b2_2d)
    return emb, out_z


def _init_linear(key, in_features, out_features):
    """Deterministic init mimicking nn.Linear's U(-1/sqrt(in), 1/sqrt(in))."""
    kw, kb = jax.random.split(key)
    bound = 1.0 / jnp.sqrt(jnp.float32(in_features))
    # stored transposed: (in, out)
    w_t = jax.random.uniform(kw, (in_features, out_features),
                             jnp.float32, -bound, bound)
    b = jax.random.uniform(kb, (out_features,), jnp.float32, -bound, bound)
    return w_t, b


def _reference(features, w1_t, b1, w2_t, b2, matmul_dtype=jnp.bfloat16):
    """Plain-JAX reference using the same bf16 matmul casts as the kernel."""
    emb = jnp.maximum(
        jnp.dot(features.astype(matmul_dtype), w1_t.astype(matmul_dtype),
                preferred_element_type=jnp.float32) + b1, 0.0)
    z = jnp.dot(emb.astype(matmul_dtype), w2_t.astype(matmul_dtype),
                preferred_element_type=jnp.float32) + b2
    z = z / jnp.maximum(jnp.sqrt(jnp.sum(z * z, axis=1, keepdims=True)), 1e-12)
    return emb, z


if __name__ == "__main__":
    # Small shapes consistent with the module: opt.resSize=256, opt.embedSize=128,
    # opt.outzSize=128, batch=8.
    B, RES, EMBED, OUTZ = 8, 256, 128, 128

    key = jax.random.PRNGKey(0)
    kx, k1, k2 = jax.random.split(key, 3)

    features = jax.random.normal(kx, (B, RES), jnp.float32)
    w1_t, b1 = _init_linear(k1, RES, EMBED)    # fc1: resSize -> embedSize
    w2_t, b2 = _init_linear(k2, EMBED, OUTZ)   # fc2: embedSize -> outzSize

    embedding, out_z = embedding_net_forward(features, w1_t, b1, w2_t, b2)
    embedding = jax.block_until_ready(embedding)
    out_z = jax.block_until_ready(out_z)

    emb_ref, z_ref = _reference(features, w1_t, b1, w2_t, b2)
    assert embedding.shape == (B, EMBED) and out_z.shape == (B, OUTZ)
    assert jnp.allclose(embedding, emb_ref, atol=2e-2, rtol=2e-2)
    assert jnp.allclose(out_z, z_ref, atol=2e-2, rtol=2e-2)
    # Normalized rows should have unit L2 norm.
    assert jnp.allclose(jnp.linalg.norm(out_z, axis=1), 1.0, atol=1e-3)

    # Also exercise the ragged-batch path (no wrapper pad/slice, in-kernel tail
    # mask + Pallas partial edge blocks) and reduced-traffic bf16 outputs.
    B2 = 10
    features2 = jax.random.normal(jax.random.PRNGKey(1), (B2, RES), jnp.float32)
    emb2, z2 = embedding_net_forward(features2, w1_t, b1, w2_t, b2, tile_b=8,
                                     embedding_dtype=jnp.bfloat16,
                                     outz_dtype=jnp.bfloat16)
    emb2 = jax.block_until_ready(emb2)
    z2 = jax.block_until_ready(z2)
    emb2_ref, z2_ref = _reference(features2, w1_t, b1, w2_t, b2)
    assert emb2.shape == (B2, EMBED) and z2.shape == (B2, OUTZ)
    assert emb2.dtype == jnp.bfloat16 and z2.dtype == jnp.bfloat16
    assert jnp.allclose(emb2.astype(jnp.float32), emb2_ref, atol=3e-2, rtol=3e-2)
    assert jnp.allclose(z2.astype(jnp.float32), z2_ref, atol=3e-2, rtol=3e-2)

    print("KERNEL_OK")
</pallas_src>

<mosaic_0001>
module attributes {stable_mosaic.version = 11 : i64} {
  func.func @_embedding_net_kernel(%arg0: i32, %arg1: memref<8x256xf32, #tpu.memory_space<vmem>>, %arg2: memref<256x128xbf16, #tpu.memory_space<vmem>>, %arg3: memref<1x128xf32, #tpu.memory_space<vmem>>, %arg4: memref<128x128xbf16, #tpu.memory_space<vmem>>, %arg5: memref<1x128xf32, #tpu.memory_space<vmem>>, %arg6: memref<8x128xf32, #tpu.memory_space<vmem>>, %arg7: memref<8x128xf32, #tpu.memory_space<vmem>>) attributes {dimension_semantics = [#tpu.dimension_semantics<parallel>], iteration_bounds = array<i64: 1>, scalar_prefetch = 0 : i64, scratch_operands = 0 : i64, tpu.core_type = #tpu.core_type<tc>, window_params = [{transform_indices = @transform_0, window_bounds = array<i64: 8, 256>}, {pipeline_mode = #tpu.pipeline_mode<synchronous>, transform_indices = @transform_1, window_bounds = array<i64: 256, 128>}, {pipeline_mode = #tpu.pipeline_mode<synchronous>, transform_indices = @transform_2, window_bounds = array<i64: 1, 128>}, {pipeline_mode = #tpu.pipeline_mode<synchronous>, transform_indices = @transform_3, window_bounds = array<i64: 128, 128>}, {pipeline_mode = #tpu.pipeline_mode<synchronous>, transform_indices = @transform_4, window_bounds = array<i64: 1, 128>}, {transform_indices = @transform_5, window_bounds = array<i64: 8, 128>}, {transform_indices = @transform_6, window_bounds = array<i64: 8, 128>}]} {
    %c0 = arith.constant 0 : index
    %c0_0 = arith.constant 0 : index
    %0 = vector.load %arg1[%c0, %c0_0] : memref<8x256xf32, #tpu.memory_space<vmem>>, vector<8x256xf32>
    %1 = arith.truncf %0 : vector<8x256xf32> to vector<8x256xbf16>
    %c0_1 = arith.constant 0 : index
    %c0_2 = arith.constant 0 : index
    %2 = vector.load %arg2[%c0_1, %c0_2] : memref<256x128xbf16, #tpu.memory_space<vmem>>, vector<256x128xbf16>
    %cst = arith.constant dense<0.000000e+00> : vector<8x128xf32>
    %3 = tpu.matmul %1, %2, %cst {dimension_numbers = #tpu.dot_dimension_numbers<[1], [0], [0], [1], [0, 0, 1, 1], [], []>} : vector<8x256xbf16>, vector<256x128xbf16>, vector<8x128xf32> -> vector<8x128xf32>
    %c0_3 = arith.constant 0 : index
    %c0_4 = arith.constant 0 : index
    %4 = vector.load %arg3[%c0_3, %c0_4] : memref<1x128xf32, #tpu.memory_space<vmem>>, vector<1x128xf32>
    %5 = vector.broadcast %4 : vector<1x128xf32> to vector<8x128xf32>
    %6 = arith.addf %3, %5 : vector<8x128xf32>
    %cst_5 = arith.constant 0.000000e+00 : f32
    %7 = vector.broadcast %cst_5 : f32 to vector<8x128xf32>
    %8 = arith.maximumf %6, %7 : vector<8x128xf32>
    %9 = arith.truncf %8 : vector<8x128xf32> to vector<8x128xbf16>
    %c0_6 = arith.constant 0 : index
    %c0_7 = arith.constant 0 : index
    %10 = vector.load %arg4[%c0_6, %c0_7] : memref<128x128xbf16, #tpu.memory_space<vmem>>, vector<128x128xbf16>
    %cst_8 = arith.constant dense<0.000000e+00> : vector<8x128xf32>
    %11 = tpu.matmul %9, %10, %cst_8 {dimension_numbers = #tpu.dot_dimension_numbers<[1], [0], [0], [1], [0, 0, 1, 1], [], []>} : vector<8x128xbf16>, vector<128x128xbf16>, vector<8x128xf32> -> vector<8x128xf32>
    %c0_9 = arith.constant 0 : index
    %c0_10 = arith.constant 0 : index
    %12 = vector.load %arg5[%c0_9, %c0_10] : memref<1x128xf32, #tpu.memory_space<vmem>>, vector<1x128xf32>
    %13 = vector.broadcast %12 : vector<1x128xf32> to vector<8x128xf32>
    %14 = arith.addf %11, %13 : vector<8x128xf32>
    %15 = arith.mulf %14, %14 : vector<8x128xf32>
    %cst_11 = arith.constant dense<0.000000e+00> : vector<8xf32>
    %16 = vector.multi_reduction <add>, %15, %cst_11 [1] : vector<8x128xf32> to vector<8xf32>
    %17 = vector.shape_cast %16 : vector<8xf32> to vector<8x1xf32>
    %cst_12 = arith.constant 1.000000e-24 : f32
    %18 = vector.broadcast %cst_12 : f32 to vector<8x1xf32>
    %19 = arith.maximumf %17, %18 : vector<8x1xf32>
    %20 = math.rsqrt %19 : vector<8x1xf32>
    %21 = vector.broadcast %20 : vector<8x1xf32> to vector<8x128xf32>
    %22 = arith.mulf %14, %21 : vector<8x128xf32>
    %c0_13 = arith.constant 0 : index
    %c0_14 = arith.constant 0 : index
    %23 = vector.load %arg6[%c0_13, %c0_14] : memref<8x128xf32, #tpu.memory_space<vmem>>, vector<8x128xf32>
    tpu.vector_store %arg6[%c0_13, %c0_14], %8 {strides = array<i32>} : memref<8x128xf32, #tpu.memory_space<vmem>>, vector<8x128xf32>,
    %c0_15 = arith.constant 0 : index
    %c0_16 = arith.constant 0 : index
    %24 = vector.load %arg7[%c0_15, %c0_16] : memref<8x128xf32, #tpu.memory_space<vmem>>, vector<8x128xf32>
    tpu.vector_store %arg7[%c0_15, %c0_16], %22 {strides = array<i32>} : memref<8x128xf32, #tpu.memory_space<vmem>>, vector<8x128xf32>,
    return
  }
  func.func @transform_0(%arg0: i32) -> (i32, i32) {
    %c0_i32 = arith.constant 0 : i32
    %c0_i32_0 = arith.constant 0 : i32
    return %arg0, %c0_i32 : i32, i32
  }
  func.func @transform_1(%arg0: i32) -> (i32, i32) {
    %c0_i32 = arith.constant 0 : i32
    %c0_i32_0 = arith.constant 0 : i32
    %c0_i32_1 = arith.constant 0 : i32
    return %c0_i32, %c0_i32_0 : i32, i32
  }
  func.func @transform_2(%arg0: i32) -> (i32, i32) {
    %c0_i32 = arith.constant 0 : i32
    %c0_i32_0 = arith.constant 0 : i32
    %c0_i32_1 = arith.constant 0 : i32
    return %c0_i32, %c0_i32_0 : i32, i32
  }
  func.func @transform_3(%arg0: i32) -> (i32, i32) {
    %c0_i32 = arith.constant 0 : i32
    %c0_i32_0 = arith.constant 0 : i32
    %c0_i32_1 = arith.constant 0 : i32
    return %c0_i32, %c0_i32_0 : i32, i32
  }
  func.func @transform_4(%arg0: i32) -> (i32, i32) {
    %c0_i32 = arith.constant 0 : i32
    %c0_i32_0 = arith.constant 0 : i32
    %c0_i32_1 = arith.constant 0 : i32
    return %c0_i32, %c0_i32_0 : i32, i32
  }
  func.func @transform_5(%arg0: i32) -> (i32, i32) {
    %c0_i32 = arith.constant 0 : i32
    %c0_i32_0 = arith.constant 0 : i32
    return %arg0, %c0_i32 : i32, i32
  }
  func.func @transform_6(%arg0: i32) -> (i32, i32) {
    %c0_i32 = arith.constant 0 : i32
    %c0_i32_0 = arith.constant 0 : i32
    return %arg0, %c0_i32 : i32, i32
  }
}

</mosaic_0001>

<llo_original>
// kernel: tpu_custom_call.1
$region0: #{tpu_custom_call.1}
  #allocation0 [shape = 'u32[]', space=smem, size = 0x4, offset = 0x4, fixed_abs, tag = 'smem constant byte address 0x4 - core index']
  #allocation1 [shape = 'u32[144,128]{1,0:T(1,128)}', space=vmem, size = 0x12000, scoped, tag = 'internal scratch']
  %s0 = inlined_call_operand.hbm [shape: f32[8,256], index: 0, kind: input, shape index: {}]
  %s1 = inlined_call_operand.hbm [shape: bf16[256,128], index: 1, kind: input, shape index: {}]
  %s2 = inlined_call_operand.vmem [shape: f32[1,128], index: 2, kind: input, shape index: {}]
  %s3 = inlined_call_operand.hbm [shape: bf16[128,128], index: 3, kind: input, shape index: {}]
  %s4 = inlined_call_operand.vmem [shape: f32[1,128], index: 4, kind: input, shape index: {}]
  %s5 = inlined_call_operand.hbm [shape: f32[8,128], index: 5, kind: output, shape index: {0}]
  %s6 = inlined_call_operand.hbm [shape: f32[8,128], index: 6, kind: output, shape index: {1}]
  %7 = xla_tuple %s5, %s6
  %s8 = sld [smem:[#allocation0]]
  $region50: #{tpu_custom_call.1} parent=0
    _
  %s10 = ssub.s32 1, %s8
  %s11 = scalar_select 0, %s10, %s8
  $region1: #{tpu_custom_call.1} parent=0
    #allocation2 [shape = 'u8[8192]{0}', space=vmem, size = 0x2000, scoped, tag = 'input window, operand 0, single buffered']
    #allocation3 [shape = 's32[1]{0}', space=sflag, size = 0x4, scoped, tag = 'scoped memory for tpu_custom_call.1']
    #allocation4 [shape = 's32[1]{0}', space=sflag, size = 0x4, scoped, tag = 'scoped memory for tpu_custom_call.1']
    #allocation5 [shape = 'u8[65536]{0}', space=vmem, size = 0x10000, scoped, tag = 'input window, operand 1, single buffered']
    #allocation6 [shape = 's32[1]{0}', space=sflag, size = 0x4, scoped, tag = 'scoped memory for tpu_custom_call.1']
    #allocation7 [shape = 'u8[32768]{0}', space=vmem, size = 0x8000, scoped, tag = 'input window, operand 3, single buffered']
    #allocation8 [shape = 'u8[4096]{0}', space=vmem, size = 0x1000, scoped, tag = 'output window, operand 0, single buffered']
    #allocation9 [shape = 'u8[4096]{0}', space=vmem, size = 0x1000, scoped, tag = 'output window, operand 1, single buffered']
    #allocation10 [shape = 's32[1]{0}', space=sflag, size = 0x4, scoped, tag = 'scoped memory for tpu_custom_call.1']
    %12 = vsyncpa [#allocation3], 0
    %13 = vsyncpa [#allocation6], 0
    %14 = vsyncpa [#allocation4], 0
    %15 = vsyncpa [#allocation10], 0
    // Predicated region
    $region2: #{tpu_custom_call.1} parent=1 // pred_check
      _
    $region3: #{tpu_custom_call.1} parent=1 // pred_check_branch
      %17 = sbr.rel (0) target = $region5
    $region4: #{tpu_custom_call.1} parent=1 // pred_region
      %s19 = ssub.s32 256, 256
      %20 = vsyncadd [#allocation3], %s19
      %s22 = sshll.u32 [#allocation2], 4
      %s23 = int_to_ptr.vmem [resolvable:$true] %s22
      %25 = dma.hbm_to_vmem [thread:$0]  %s0, 256, %s23, [#allocation3]
    $region5: #{tpu_custom_call.1} parent=1 // pred_fallthru
      _
    // Predicated region
    $region6: #{tpu_custom_call.1} parent=1 // pred_check
      _
    $region7: #{tpu_custom_call.1} parent=1 // pred_check_branch
      %27 = sbr.rel (0) target = $region9
    $region8: #{tpu_custom_call.1} parent=1 // pred_region
      %s29 = ssub.s32 2048, 2048
      %30 = vsyncadd [#allocation6], %s29
      %s31 = sshll.u32 [#allocation5], 4
      %s32 = int_to_ptr.vmem [resolvable:$true] %s31
      %37 = dma.hbm_to_vmem [thread:$0]  %s1, 2048, %s32, [#allocation6], 64, 64, 4
    $region9: #{tpu_custom_call.1} parent=1 // pred_fallthru
      _
    // Predicated region
    $region10: #{tpu_custom_call.1} parent=1 // pred_check
      _
    $region11: #{tpu_custom_call.1} parent=1 // pred_check_branch
      %39 = sbr.rel (0) target = $region13
    $region12: #{tpu_custom_call.1} parent=1 // pred_region
      _
    $region13: #{tpu_custom_call.1} parent=1 // pred_fallthru
      _
    // Predicated region
    $region14: #{tpu_custom_call.1} parent=1 // pred_check
      _
    $region15: #{tpu_custom_call.1} parent=1 // pred_check_branch
      %41 = sbr.rel (0) target = $region17
    $region16: #{tpu_custom_call.1} parent=1 // pred_region
      %s43 = ssub.s32 1024, 1024
      %44 = vsyncadd [#allocation6], %s43
      %s45 = sshll.u32 [#allocation7], 4
      %s46 = int_to_ptr.vmem [resolvable:$true] %s45
      %51 = dma.hbm_to_vmem [thread:$0]  %s3, 1024, %s46, [#allocation6], 64, 64, 4
    $region17: #{tpu_custom_call.1} parent=1 // pred_fallthru
      _
    // Predicated region
    $region18: #{tpu_custom_call.1} parent=1 // pred_check
      _
    $region19: #{tpu_custom_call.1} parent=1 // pred_check_branch
      %53 = sbr.rel (0) target = $region21
    $region20: #{tpu_custom_call.1} parent=1 // pred_region
      _
    $region21: #{tpu_custom_call.1} parent=1 // pred_fallthru
      _
    // Predicated region
    $region22: #{tpu_custom_call.1} parent=1 // pred_check
      _
    $region23: #{tpu_custom_call.1} parent=1 // pred_check_branch
      %55 = sbr.rel (0) target = $region25
    $region24: #{tpu_custom_call.1} parent=1 // pred_region
      %56 = dma.done [#allocation3], 256
    $region25: #{tpu_custom_call.1} parent=1 // pred_fallthru
      _
    // Predicated region
    $region26: #{tpu_custom_call.1} parent=1 // pred_check
      _
    $region27: #{tpu_custom_call.1} parent=1 // pred_check_branch
      %58 = sbr.rel (0) target = $region29
    $region28: #{tpu_custom_call.1} parent=1 // pred_region
      %59 = dma.done [#allocation6], 2048
    $region29: #{tpu_custom_call.1} parent=1 // pred_fallthru
      _
    // Predicated region
    $region30: #{tpu_custom_call.1} parent=1 // pred_check
      _
    $region31: #{tpu_custom_call.1} parent=1 // pred_check_branch
      %61 = sbr.rel (0) target = $region33
    $region32: #{tpu_custom_call.1} parent=1 // pred_region
      %62 = dma.done [#allocation6], 1024
    $region33: #{tpu_custom_call.1} parent=1 // pred_fallthru
      _
    %v64 = vld [vmem:[#allocation2] sm:$0xff]
    %v65 = vld [vmem:[#allocation2 + $0x8] sm:$0xff]
    %v66 = vpack.c.bf16 %v64, %v64
    %v67 = vpack.c.bf16 %v65, %v65
    %v68 = vld [vmem:[#allocation5] sm:$0xf]
    %v69 = vld [vmem:[#allocation5 + $0x4] sm:$0xf]
    %v70 = vld [vmem:[#allocation5 + $0x8] sm:$0xf]
    %v71 = vld [vmem:[#allocation5 + $0xc] sm:$0xf]
    %v72 = vld [vmem:[#allocation5 + $0x10] sm:$0xf]
    %v73 = vld [vmem:[#allocation5 + $0x14] sm:$0xf]
    %v74 = vld [vmem:[#allocation5 + $0x18] sm:$0xf]
    %v75 = vld [vmem:[#allocation5 + $0x1c] sm:$0xf]
    %v76 = vld [vmem:[#allocation5 + $0x20] sm:$0xf]
    %v77 = vld [vmem:[#allocation5 + $0x24] sm:$0xf]
    %v78 = vld [vmem:[#allocation5 + $0x28] sm:$0xf]
    %v79 = vld [vmem:[#allocation5 + $0x2c] sm:$0xf]
    %v80 = vld [vmem:[#allocation5 + $0x30] sm:$0xf]
    %v81 = vld [vmem:[#allocation5 + $0x34] sm:$0xf]
    %v82 = vld [vmem:[#allocation5 + $0x38] sm:$0xf]
    %v83 = vld [vmem:[#allocation5 + $0x3c] sm:$0xf]
    %v84 = vld [vmem:[#allocation5 + $0x40] sm:$0xf]
    %v85 = vld [vmem:[#allocation5 + $0x44] sm:$0xf]
    %v86 = vld [vmem:[#allocation5 + $0x48] sm:$0xf]
    %v87 = vld [vmem:[#allocation5 + $0x4c] sm:$0xf]
    %v88 = vld [vmem:[#allocation5 + $0x50] sm:$0xf]
    %v89 = vld [vmem:[#allocation5 + $0x54] sm:$0xf]
    %v90 = vld [vmem:[#allocation5 + $0x58] sm:$0xf]
    %v91 = vld [vmem:[#allocation5 + $0x5c] sm:$0xf]
    %v92 = vld [vmem:[#allocation5 + $0x60] sm:$0xf]
    %v93 = vld [vmem:[#allocation5 + $0x64] sm:$0xf]
    %v94 = vld [vmem:[#allocation5 + $0x68] sm:$0xf]
    %v95 = vld [vmem:[#allocation5 + $0x6c] sm:$0xf]
    %v96 = vld [vmem:[#allocation5 + $0x70] sm:$0xf]
    %v97 = vld [vmem:[#allocation5 + $0x74] sm:$0xf]
    %v98 = vld [vmem:[#allocation5 + $0x78] sm:$0xf]
    %v99 = vld [vmem:[#allocation5 + $0x7c] sm:$0xf]
    %v100 = vld [vmem:[%s2] sm:$0x1]
    %v102 = vlaneseq
    %v103 = vshrl.u32 %v102, 7
    %v104 = vsub.s32 0, %v103
    %v105 = vrot.slane %v100, %v104
    %v139 = vunpack.c.l.b16 %v68
    %v140 = vunpack.c.l.b16 %v69
    %v141 = vunpack.c.l.b16 %v70
    %v142 = vunpack.c.l.b16 %v71
    %v143 = vunpack.c.l.b16 %v72
    %v144 = vunpack.c.l.b16 %v73
    %v145 = vunpack.c.l.b16 %v74
    %v146 = vunpack.c.l.b16 %v75
    %v147 = vunpack.c.l.b16 %v76
    %v148 = vunpack.c.l.b16 %v77
    %v149 = vunpack.c.l.b16 %v78
    %v150 = vunpack.c.l.b16 %v79
    %v151 = vunpack.c.l.b16 %v80
    %v152 = vunpack.c.l.b16 %v81
    %v153 = vunpack.c.l.b16 %v82
    %v154 = vunpack.c.l.b16 %v83
    %v155 = vunpack.c.l.b16 %v84
    %v156 = vunpack.c.l.b16 %v85
    %v157 = vunpack.c.l.b16 %v86
    %v158 = vunpack.c.l.b16 %v87
    %v159 = vunpack.c.l.b16 %v88
    %v160 = vunpack.c.l.b16 %v89
    %v161 = vunpack.c.l.b16 %v90
    %v162 = vunpack.c.l.b16 %v91
    %v163 = vunpack.c.l.b16 %v92
    %v164 = vunpack.c.l.b16 %v93
    %v165 = vunpack.c.l.b16 %v94
    %v166 = vunpack.c.l.b16 %v95
    %v167 = vunpack.c.l.b16 %v96
    %v168 = vunpack.c.l.b16 %v97
    %v169 = vunpack.c.l.b16 %v98
    %v170 = vunpack.c.l.b16 %v99
    %v171 = vpack.c.b16 %v140, %v139
    %v172 = vpack.c.b16 %v142, %v141
    %v173 = vpack.c.b16 %v144, %v143
    %v174 = vpack.c.b16 %v146, %v145
    %v175 = vpack.c.b16 %v148, %v147
    %v176 = vpack.c.b16 %v150, %v149
    %v177 = vpack.c.b16 %v152, %v151
    %v178 = vpack.c.b16 %v154, %v153
    %v179 = vpack.c.b16 %v156, %v155
    %v180 = vpack.c.b16 %v158, %v157
    %v181 = vpack.c.b16 %v160, %v159
    %v182 = vpack.c.b16 %v162, %v161
    %v183 = vpack.c.b16 %v164, %v163
    %v184 = vpack.c.b16 %v166, %v165
    %v185 = vpack.c.b16 %v168, %v167
    %v186 = vpack.c.b16 %v170, %v169
    %203 = vmatprep.subr.bf16.mxu0 0
    %204 = vmatpush1.bf16.msra.mxu0 %v178
    %205 = vmatprep.subr.bf16.mxu0 0
    %206 = vmatpush1.bf16.msra.mxu0 %v177
    %207 = vmatprep.subr.bf16.mxu0 0
    %208 = vmatpush1.bf16.msra.mxu0 %v176
    %209 = vmatprep.subr.bf16.mxu0 0
    %210 = vmatpush1.bf16.msra.mxu0 %v175
    %211 = vmatprep.subr.bf16.mxu0 0
    %212 = vmatpush1.bf16.msra.mxu0 %v174
    %213 = vmatprep.subr.bf16.mxu0 0
    %214 = vmatpush1.bf16.msra.mxu0 %v173
    %215 = vmatprep.subr.bf16.mxu0 0
    %216 = vmatpush1.bf16.msra.mxu0 %v172
    %217 = vmatprep.subr.bf16.mxu0 0
    %218 = vmatpush1.bf16.msra.mxu0 %v171
    %219 = vmatprep.subr.bf16.mxu0 0
    %220 = vmatpush2.bf16.msra.mxu0 %v186
    %221 = vmatprep.subr.bf16.mxu0 0
    %222 = vmatpush2.bf16.msra.mxu0 %v185
    %223 = vmatprep.subr.bf16.mxu0 0
    %224 = vmatpush2.bf16.msra.mxu0 %v184
    %225 = vmatprep.subr.bf16.mxu0 0
    %226 = vmatpush2.bf16.msra.mxu0 %v183
    %227 = vmatprep.subr.bf16.mxu0 0
    %228 = vmatpush2.bf16.msra.mxu0 %v182
    %229 = vmatprep.subr.bf16.mxu0 0
    %230 = vmatpush2.bf16.msra.mxu0 %v181
    %231 = vmatprep.subr.bf16.mxu0 0
    %232 = vmatpush2.bf16.msra.mxu0 %v180
    %233 = vmatprep.subr.bf16.mxu0 0
    %234 = vmatpush2.bf16.msra.mxu0 %v179
    %235 = vmatprep.mubr.bf16.mxu0 %v67
    %236 = vmatmul.mubr.bf16.gmra.mxu0 %v66
    %v237 = vpop.f32.mrf.mxu0
    %v238 = vadd.f32 %v105, %v237
    %v239 = vpop.f32.mrf.mxu0
    %v240 = vpop.f32.mrf.mxu0
    %v241 = vpop.f32.mrf.mxu0
    %242 = vdwg.mxu0
    %v243 = vmax.f32 %v238, 0.0
    %v244 = vpack.c.bf16 %v243, %v243
    %v245 = vld [vmem:[#allocation7] sm:$0xf]
    %v246 = vld [vmem:[#allocation7 + $0x4] sm:$0xf]
    %v247 = vld [vmem:[#allocation7 + $0x8] sm:$0xf]
    %v248 = vld [vmem:[#allocation7 + $0xc] sm:$0xf]
    %v249 = vld [vmem:[#allocation7 + $0x10] sm:$0xf]
    %v250 = vld [vmem:[#allocation7 + $0x14] sm:$0xf]
    %v251 = vld [vmem:[#allocation7 + $0x18] sm:$0xf]
    %v252 = vld [vmem:[#allocation7 + $0x1c] sm:$0xf]
    %v253 = vld [vmem:[#allocation7 + $0x20] sm:$0xf]
    %v254 = vld [vmem:[#allocation7 + $0x24] sm:$0xf]
    %v255 = vld [vmem:[#allocation7 + $0x28] sm:$0xf]
    %v256 = vld [vmem:[#allocation7 + $0x2c] sm:$0xf]
    %v257 = vld [vmem:[#allocation7 + $0x30] sm:$0xf]
    %v258 = vld [vmem:[#allocation7 + $0x34] sm:$0xf]
    %v259 = vld [vmem:[#allocation7 + $0x38] sm:$0xf]
    %v260 = vld [vmem:[#allocation7 + $0x3c] sm:$0xf]
    %v261 = vld [vmem:[%s4] sm:$0x1]
    %v263 = vlaneseq
    %v264 = vshrl.u32 %v263, 7
    %v265 = vsub.s32 0, %v264
    %v266 = vrot.slane %v261, %v265
    %v284 = vunpack.c.l.b16 %v245
    %v285 = vunpack.c.l.b16 %v246
    %v286 = vunpack.c.l.b16 %v247
    %v287 = vunpack.c.l.b16 %v248
    %v288 = vunpack.c.l.b16 %v249
    %v289 = vunpack.c.l.b16 %v250
    %v290 = vunpack.c.l.b16 %v251
    %v291 = vunpack.c.l.b16 %v252
    %v292 = vunpack.c.l.b16 %v253
    %v293 = vunpack.c.l.b16 %v254
    %v294 = vunpack.c.l.b16 %v255
    %v295 = vunpack.c.l.b16 %v256
    %v296 = vunpack.c.l.b16 %v257
    %v297 = vunpack.c.l.b16 %v258
    %v298 = vunpack.c.l.b16 %v259
    %v299 = vunpack.c.l.b16 %v260
    %v300 = vpack.c.b16 %v285, %v284
    %v301 = vpack.c.b16 %v287, %v286
    %v302 = vpack.c.b16 %v289, %v288
    %v303 = vpack.c.b16 %v291, %v290
    %v304 = vpack.c.b16 %v293, %v292
    %v305 = vpack.c.b16 %v295, %v294
    %v306 = vpack.c.b16 %v297, %v296
    %v307 = vpack.c.b16 %v299, %v298
    %316 = vmatprep.subr.bf16.mxu0 0
    %317 = vmatpush1.bf16.msra.mxu0 %v307
    %318 = vmatprep.subr.bf16.mxu0 0
    %319 = vmatpush1.bf16.msra.mxu0 %v306
    %320 = vmatprep.subr.bf16.mxu0 0
    %321 = vmatpush1.bf16.msra.mxu0 %v305
    %322 = vmatprep.subr.bf16.mxu0 0
    %323 = vmatpush1.bf16.msra.mxu0 %v304
    %324 = vmatprep.subr.bf16.mxu0 0
    %325 = vmatpush1.bf16.msra.mxu0 %v303
    %326 = vmatprep.subr.bf16.mxu0 0
    %327 = vmatpush1.bf16.msra.mxu0 %v302
    %328 = vmatprep.subr.bf16.mxu0 0
    %329 = vmatpush1.bf16.msra.mxu0 %v301
    %330 = vmatprep.subr.bf16.mxu0 0
    %331 = vmatpush1.bf16.msra.mxu0 %v300
    %332 = vmatprep.subr.bf16.mxu0 0
    %333 = vmatpush2.bf16.msra.mxu0 0
    %334 = vmatprep.subr.bf16.mxu0 0
    %335 = vmatpush2.bf16.msra.mxu0 0
    %336 = vmatprep.subr.bf16.mxu0 0
    %337 = vmatpush2.bf16.msra.mxu0 0
    %338 = vmatprep.subr.bf16.mxu0 0
    %339 = vmatpush2.bf16.msra.mxu0 0
    %340 = vmatprep.subr.bf16.mxu0 0
    %341 = vmatpush2.bf16.msra.mxu0 0
    %342 = vmatprep.subr.bf16.mxu0 0
    %343 = vmatpush2.bf16.msra.mxu0 0
    %344 = vmatprep.subr.bf16.mxu0 0
    %345 = vmatpush2.bf16.msra.mxu0 0
    %346 = vmatprep.subr.bf16.mxu0 0
    %347 = vmatpush2.bf16.msra.mxu0 0
    %348 = vmatprep.mubr.bf16.mxu0 0
    %349 = vmatmul.mubr.bf16.gmra.mxu0 %v244
    %v350 = vpop.f32.mrf.mxu0
    %v351 = vadd.f32 %v266, %v350
    %v352 = vpop.f32.mrf.mxu0
    %v353 = vpop.f32.mrf.mxu0
    %v354 = vpop.f32.mrf.mxu0
    %355 = vdwg.mxu0
    %v356 = vmul.f32 %v351, %v351
    %357 = vadd.xlane.f32.xlu0 %v356
    %v358 = vpop.xlane.xlu0 %357
    %v359 = vmax.f32 %v358, 1e-24
    %v360 = vrsqrt.pop %v359
    %v361 = vmul.f32 %v351, %v360
    %362 = vst [vmem:[#allocation8] sm:$0xff] %v243
    %363 = vst [vmem:[#allocation9] sm:$0xff] %v361
    // Predicated region
    $region34: #{tpu_custom_call.1} parent=1 // pred_check
      _
    $region35: #{tpu_custom_call.1} parent=1 // pred_check_branch
      %365 = sbr.rel (0) target = $region37
    $region36: #{tpu_custom_call.1} parent=1 // pred_region
      %s367 = ssub.s32 128, 128
      %368 = vsyncadd [#allocation4], %s367
      %s370 = sshll.u32 [#allocation8], 4
      %s371 = int_to_ptr.vmem [resolvable:$true] %s370
      %373 = dma.vmem_to_hbm [thread:$0]  %s371, 128, %s5, [#allocation4]
    $region37: #{tpu_custom_call.1} parent=1 // pred_fallthru
      _
    // Predicated region
    $region38: #{tpu_custom_call.1} parent=1 // pred_check
      _
    $region39: #{tpu_custom_call.1} parent=1 // pred_check_branch
      %375 = sbr.rel (0) target = $region41
    $region40: #{tpu_custom_call.1} parent=1 // pred_region
      %s377 = ssub.s32 128, 128
      %378 = vsyncadd [#allocation10], %s377
      %s380 = sshll.u32 [#allocation9], 4
      %s381 = int_to_ptr.vmem [resolvable:$true] %s380
      %383 = dma.vmem_to_hbm [thread:$0]  %s381, 128, %s6, [#allocation10]
    $region41: #{tpu_custom_call.1} parent=1 // pred_fallthru
      _
    // Predicated region
    $region42: #{tpu_custom_call.1} parent=1 // pred_check
      _
    $region43: #{tpu_custom_call.1} parent=1 // pred_check_branch
      %385 = sbr.rel (0) target = $region45
    $region44: #{tpu_custom_call.1} parent=1 // pred_region
      %386 = dma.done [#allocation4], 128
    $region45: #{tpu_custom_call.1} parent=1 // pred_fallthru
      _
    // Predicated region
    $region46: #{tpu_custom_call.1} parent=1 // pred_check
      _
    $region47: #{tpu_custom_call.1} parent=1 // pred_check_branch
      %388 = sbr.rel (0) target = $region49
    $region48: #{tpu_custom_call.1} parent=1 // pred_region
      %389 = dma.done [#allocation10], 128
    $region49: #{tpu_custom_call.1} parent=1 // pred_fallthru
      _
    %390 = vsyncpa [#allocation3], 1
    %391 = vsyncpa [#allocation6], 1
    %392 = vsyncpa [#allocation4], 1
    %393 = vsyncpa [#allocation10], 1

</llo_original>
